<compile_context>
chip_gen: v6e
topology: v6e:2x2x1
jax: 0.10.0
libtpu: 0.0.40
codegen_flags: <defaults>
</compile_context>

<pallas_src>
import functools

import jax
import jax.numpy as jnp
from jax.experimental import pallas as pl
from jax.experimental.pallas import tpu as pltpu

_OUT_R, _OUT_L = 8, 128  # output tile, (8,128)-aligned so the out BlockSpec is legal


def _cdiv(a: int, b: int) -> int:
    return (a + b - 1) // b


def _choose_layout(n: int):
    """Pick (lanes, padded_rows, tile_rows) for the per-batch flattened axis."""
    for lanes in (2048, 1024, 512, 256, 128):
        if n % lanes == 0:
            break
    else:
        lanes = 512  # fall back to zero-padding (corrected exactly in epilogue)
    rows = _cdiv(n, lanes)
    # Target ~2 MiB f32 per input block (4 MiB double-buffered + 4 MiB scratch).
    rows_target = max(8, (((2 << 20) // (4 * lanes)) // 8) * 8)
    if rows <= rows_target:
        tile_rows = rows          # block dim == full dim -> (8,128) rule satisfied
        rows_pad = rows
    else:
        tile_rows = rows_target   # multiple of 8
        rows_pad = _cdiv(rows, tile_rows) * tile_rows
    return lanes, rows_pad, tile_rows


def _hs_loss_kernel(x_ref, o_ref, abs_acc, x_acc, *, scale, den_eps, abs_pad_corr):
    r = pl.program_id(1)

    @pl.when(r == 0)
    def _init():
        abs_acc[...] = jnp.zeros_like(abs_acc)
        x_acc[...] = jnp.zeros_like(x_acc)

    # Steady state: pure element-wise VPU work, overlapped with the block DMA.
    x = x_ref[...].astype(jnp.float32)
    abs_acc[...] += jnp.abs(x + 1e-20)
    x_acc[...] += x

    @pl.when(r == pl.num_programs(1) - 1)
    def _finalize():
        # One XLU reduction + scalar tail per batch element.
        l1 = jnp.sum(abs_acc[...]) - jnp.float32(abs_pad_corr)   # undo zero-padding
        den = jnp.sum(x_acc[...]) + jnp.float32(den_eps)          # hoisted N * 1e-40
        val = jnp.float32(scale) * (l1 * l1) / den                # folded w/(B*sqrt(N))
        o_ref[...] = jnp.broadcast_to(val, o_ref.shape).astype(jnp.float32)


def hs_loss(x, weight_loss: float = 1.0):
    """x: (B, D1, D2) array (any float dtype). Returns scalar f32 loss."""
    B, D1, D2 = x.shape
    N = D1 * D2

    lanes, rows_pad, tile_rows = _choose_layout(N)
    N_pad = rows_pad * lanes
    grid_r = rows_pad // tile_rows

    x2 = x.reshape(B, N)
    if N_pad != N:
        x2 = jnp.pad(x2, ((0, 0), (0, N_pad - N)))  # zero pad; corrected in epilogue
    x3 = x2.reshape(B, rows_pad, lanes)

    kernel = functools.partial(
        _hs_loss_kernel,
        scale=float(weight_loss) / (float(B) * float(N) ** 0.5),
        den_eps=float(N) * 1e-40,
        abs_pad_corr=float(N_pad - N) * 1e-20,
    )

    itemsize = jnp.dtype(x.dtype).itemsize
    out = pl.pallas_call(
        kernel,
        out_shape=jax.ShapeDtypeStruct((B, _OUT_R, _OUT_L), jnp.float32),
        grid_spec=pltpu.PrefetchScalarGridSpec(
            num_scalar_prefetch=0,
            grid=(B, grid_r),  # reduction axis last
            in_specs=[
                pl.BlockSpec((None, tile_rows, lanes), lambda b, r: (b, r, 0)),
            ],
            out_specs=pl.BlockSpec((None, _OUT_R, _OUT_L), lambda b, r: (b, 0, 0)),
            scratch_shapes=[
                pltpu.VMEM((tile_rows, lanes), jnp.float32),  # sum |x + 1e-20|
                pltpu.VMEM((tile_rows, lanes), jnp.float32),  # sum x
            ],
        ),
        compiler_params=pltpu.CompilerParams(
            dimension_semantics=("parallel", "arbitrary"),
            vmem_limit_bytes=32 * 1024 * 1024,  # explicit; usage is <= ~8 MiB
        ),
        cost_estimate=pl.CostEstimate(
            flops=3 * B * N_pad,
            transcendentals=0,
            bytes_accessed=B * N_pad * itemsize + B * _OUT_R * _OUT_L * 4,
        ),
    )(x3)

    # Per-batch ratios were already scaled by weight/(B*sqrt(N)); just sum.
    return jnp.sum(out[:, 0, 0])


def _hs_loss_ref(x, weight_loss: float = 1.0):
    # Pure-JAX reference mirroring the PyTorch forward exactly.
    x = x.astype(jnp.float32)
    num = jnp.sum(jnp.abs(x + 1e-20), axis=(1, 2)) ** 2
    den = jnp.sum(x + 1e-20 ** 2, axis=(1, 2))
    loss = jnp.mean(num / den)
    loss = loss / (x.shape[1] * x.shape[2]) ** 0.5
    return weight_loss * loss


if __name__ == "__main__":
    key = jax.random.PRNGKey(0)
    k0, k1, k2 = jax.random.split(key, 3)

    # Primary small shape consistent with the forward: (batch, D1, D2).
    x_small = jax.random.uniform(k0, (2, 16, 32), dtype=jnp.float32)
    out = jax.block_until_ready(hs_loss(x_small, weight_loss=1.0))
    ref = jax.block_until_ready(_hs_loss_ref(x_small, weight_loss=1.0))
    assert jnp.allclose(out, ref, rtol=1e-4, atol=1e-6), (out, ref)

    # Exercises the zero-padding / correction path (N = 960, not 128-aligned).
    x_pad = jax.random.uniform(k1, (2, 24, 40), dtype=jnp.float32)
    out_p = jax.block_until_ready(hs_loss(x_pad, weight_loss=0.5))
    ref_p = jax.block_until_ready(_hs_loss_ref(x_pad, weight_loss=0.5))
    assert jnp.allclose(out_p, ref_p, rtol=1e-4, atol=1e-6), (out_p, ref_p)

    # Exercises the multi-tile accumulation path (grid_r > 1).
    x_big = jax.random.uniform(k2, (2, 1024, 1024), dtype=jnp.float32)
    out_b = jax.block_until_ready(hs_loss(x_big, weight_loss=1.0))
    ref_b = jax.block_until_ready(_hs_loss_ref(x_big, weight_loss=1.0))
    assert jnp.allclose(out_b, ref_b, rtol=1e-4, atol=1e-5), (out_b, ref_b)

    print("KERNEL_OK")
</pallas_src>

<mosaic_0001>
module attributes {stable_mosaic.version = 11 : i64} {
  func.func @_hs_loss_kernel(%arg0: i32, %arg1: i32, %arg2: memref<1x1x512xf32, #tpu.memory_space<vmem>>, %arg3: memref<1x8x128xf32, #tpu.memory_space<vmem>>, %arg4: memref<1x512xf32, #tpu.memory_space<vmem>>, %arg5: memref<1x512xf32, #tpu.memory_space<vmem>>) attributes {dimension_semantics = [#tpu.dimension_semantics<parallel>, #tpu.dimension_semantics<arbitrary>], iteration_bounds = array<i64: 2, 1>, scalar_prefetch = 0 : i64, scratch_operands = 2 : i64, tpu.core_type = #tpu.core_type<tc>, window_params = [{transform_indices = @transform_0, window_bounds = array<i64: 1, 1, 512>}, {transform_indices = @transform_1, window_bounds = array<i64: 1, 8, 128>}]} {
    %c0_i32 = arith.constant 0 : i32
    %0 = arith.cmpi eq, %arg1, %c0_i32 : i32
    %1 = arith.extui %0 : i1 to i32
    %c0_i32_0 = arith.constant 0 : i32
    %2 = arith.cmpi ne, %1, %c0_i32_0 : i32
    scf.if %2 {
      %cst_13 = arith.constant 0.000000e+00 : f32
      %17 = vector.broadcast %cst_13 : f32 to vector<1x512xf32>
      %c0_14 = arith.constant 0 : index
      %c0_15 = arith.constant 0 : index
      %18 = vector.load %arg4[%c0_14, %c0_15] : memref<1x512xf32, #tpu.memory_space<vmem>>, vector<1x512xf32>
      tpu.vector_store %arg4[%c0_14, %c0_15], %17 {strides = array<i32>} : memref<1x512xf32, #tpu.memory_space<vmem>>, vector<1x512xf32>,
      %cst_16 = arith.constant 0.000000e+00 : f32
      %19 = vector.broadcast %cst_16 : f32 to vector<1x512xf32>
      %c0_17 = arith.constant 0 : index
      %c0_18 = arith.constant 0 : index
      %20 = vector.load %arg5[%c0_17, %c0_18] : memref<1x512xf32, #tpu.memory_space<vmem>>, vector<1x512xf32>
      tpu.vector_store %arg5[%c0_17, %c0_18], %19 {strides = array<i32>} : memref<1x512xf32, #tpu.memory_space<vmem>>, vector<1x512xf32>,
    } else {
    }
    %c0 = arith.constant 0 : index
    %c0_1 = arith.constant 0 : index
    %c0_2 = arith.constant 0 : index
    %3 = vector.load %arg2[%c0, %c0_1, %c0_2] : memref<1x1x512xf32, #tpu.memory_space<vmem>>, vector<1x1x512xf32>
    %4 = vector.shape_cast %3 : vector<1x1x512xf32> to vector<1x512xf32>
    %c0_3 = arith.constant 0 : index
    %c0_4 = arith.constant 0 : index
    %5 = vector.load %arg4[%c0_3, %c0_4] : memref<1x512xf32, #tpu.memory_space<vmem>>, vector<1x512xf32>
    %cst = arith.constant 9.99999968E-21 : f32
    %6 = vector.broadcast %cst : f32 to vector<1x512xf32>
    %7 = arith.addf %4, %6 : vector<1x512xf32>
    %8 = math.absf %7 : vector<1x512xf32>
    %9 = arith.addf %5, %8 : vector<1x512xf32>
    %c0_5 = arith.constant 0 : index
    %c0_6 = arith.constant 0 : index
    %10 = vector.load %arg4[%c0_5, %c0_6] : memref<1x512xf32, #tpu.memory_space<vmem>>, vector<1x512xf32>
    tpu.vector_store %arg4[%c0_5, %c0_6], %9 {strides = array<i32>} : memref<1x512xf32, #tpu.memory_space<vmem>>, vector<1x512xf32>,
    %c0_7 = arith.constant 0 : index
    %c0_8 = arith.constant 0 : index
    %11 = vector.load %arg5[%c0_7, %c0_8] : memref<1x512xf32, #tpu.memory_space<vmem>>, vector<1x512xf32>
    %12 = arith.addf %11, %4 : vector<1x512xf32>
    %c0_9 = arith.constant 0 : index
    %c0_10 = arith.constant 0 : index
    %13 = vector.load %arg5[%c0_9, %c0_10] : memref<1x512xf32, #tpu.memory_space<vmem>>, vector<1x512xf32>
    tpu.vector_store %arg5[%c0_9, %c0_10], %12 {strides = array<i32>} : memref<1x512xf32, #tpu.memory_space<vmem>>, vector<1x512xf32>,
    %c0_i32_11 = arith.constant 0 : i32
    %14 = arith.cmpi eq, %arg1, %c0_i32_11 : i32
    %15 = arith.extui %14 : i1 to i32
    %c0_i32_12 = arith.constant 0 : i32
    %16 = arith.cmpi ne, %15, %c0_i32_12 : i32
    scf.if %16 {
      %c0_13 = arith.constant 0 : index
      %c0_14 = arith.constant 0 : index
      %17 = vector.load %arg4[%c0_13, %c0_14] : memref<1x512xf32, #tpu.memory_space<vmem>>, vector<1x512xf32>
      %18 = vector.shape_cast %17 : vector<1x512xf32> to vector<1x1x512xf32>
      %cst_15 = arith.constant dense<0.000000e+00> : vector<1xf32>
      %19 = vector.multi_reduction <add>, %18, %cst_15 [1, 2] : vector<1x1x512xf32> to vector<1xf32>
      %20 = vector.shape_cast %19 : vector<1xf32> to vector<1x1x1xf32>
      %21 = vector.extract %20[0, 0, 0] : f32 from vector<1x1x1xf32>
      %cst_16 = arith.constant 0.000000e+00 : f32
      %22 = arith.subf %21, %cst_16 : f32
      %c0_17 = arith.constant 0 : index
      %c0_18 = arith.constant 0 : index
      %23 = vector.load %arg5[%c0_17, %c0_18] : memref<1x512xf32, #tpu.memory_space<vmem>>, vector<1x512xf32>
      %24 = vector.shape_cast %23 : vector<1x512xf32> to vector<1x1x512xf32>
      %cst_19 = arith.constant dense<0.000000e+00> : vector<1xf32>
      %25 = vector.multi_reduction <add>, %24, %cst_19 [1, 2] : vector<1x1x512xf32> to vector<1xf32>
      %26 = vector.shape_cast %25 : vector<1xf32> to vector<1x1x1xf32>
      %27 = vector.extract %26[0, 0, 0] : f32 from vector<1x1x1xf32>
      %cst_20 = arith.constant 5.120000e-38 : f32
      %28 = arith.addf %27, %cst_20 : f32
      %29 = arith.mulf %22, %22 : f32
      %cst_21 = arith.constant 0.0220970865 : f32
      %30 = arith.mulf %cst_21, %29 : f32
      %31 = arith.divf %30, %28 : f32
      %32 = vector.broadcast %31 : f32 to vector<8x128xf32>
      %c0_22 = arith.constant 0 : index
      %c0_23 = arith.constant 0 : index
      %c0_24 = arith.constant 0 : index
      %33 = vector.load %arg3[%c0_22, %c0_23, %c0_24] : memref<1x8x128xf32, #tpu.memory_space<vmem>>, vector<1x8x128xf32>
      %34 = vector.shape_cast %33 : vector<1x8x128xf32> to vector<8x128xf32>
      %35 = vector.shape_cast %32 : vector<8x128xf32> to vector<1x8x128xf32>
      tpu.vector_store %arg3[%c0_22, %c0_23, %c0_24], %35 {strides = array<i32>} : memref<1x8x128xf32, #tpu.memory_space<vmem>>, vector<1x8x128xf32>,
    } else {
    }
    return
  }
  func.func @transform_0(%arg0: i32, %arg1: i32) -> (i32, i32, i32) {
    %c0_i32 = arith.constant 0 : i32
    %c0_i32_0 = arith.constant 0 : i32
    return %arg0, %arg1, %c0_i32 : i32, i32, i32
  }
  func.func @transform_1(%arg0: i32, %arg1: i32) -> (i32, i32, i32) {
    %c0_i32 = arith.constant 0 : i32
    %c0_i32_0 = arith.constant 0 : i32
    %c0_i32_1 = arith.constant 0 : i32
    return %arg0, %c0_i32, %c0_i32_0 : i32, i32, i32
  }
}

</mosaic_0001>

<llo_original>
// kernel: tpu_custom_call.1
$region0: #{tpu_custom_call.1}
  #allocation0 [shape = 'u32[]', space=smem, size = 0x4, offset = 0x4, fixed_abs, tag = 'smem constant byte address 0x4 - core index']
  #allocation1 [shape = 'u32[144,128]{1,0:T(1,128)}', space=vmem, size = 0x12000, scoped, tag = 'internal scratch']
  #allocation2 [shape = 'f32[1,512]{1,0:T(1,128)}', space=vmem, size = 0x800, scoped, tag = 'scratch operand']
  #allocation3 [shape = 'f32[1,512]{1,0:T(1,128)}', space=vmem, size = 0x800, scoped, tag = 'scratch operand']
  %s0 = inlined_call_operand.hbm [shape: f32[2,1,512], index: 0, kind: input, shape index: {}]
  %s1 = inlined_call_operand.hbm [shape: f32[2,8,128], index: 1, kind: output, shape index: {}]
  %s2 = sld [smem:[#allocation0]]
  $region49: #{tpu_custom_call.1} parent=0
    _
  %s4 = ssub.s32 1, %s2
  %s5 = scalar_select 0, %s4, %s2
  $region1: #{tpu_custom_call.1} parent=0
    #allocation4 [shape = 'u8[4096]{0}', space=vmem, size = 0x1000, scoped, tag = 'input window, operand 0']
    #allocation5 [shape = 's32[2]{0}', space=sflag, size = 0x8, scoped, tag = 'scoped memory for tpu_custom_call.1']
    #allocation6 [shape = 's32[2]{0}', space=sflag, size = 0x8, scoped, tag = 'scoped memory for tpu_custom_call.1']
    #allocation7 [shape = 'u8[8192]{0}', space=vmem, size = 0x2000, scoped, tag = 'output window, operand 0']
    %6 = vsyncpa [#allocation5], 0
    %s7 = scalar_lea.sflag [#allocation5], 1
    %8 = vsyncpa %s7, 0
    %9 = vsyncpa [#allocation6], 0
    %s10 = scalar_lea.sflag [#allocation6], 1
    %11 = vsyncpa %s10, 0
    loop: start=0, step=1, limit=4
    $region2: #{tpu_custom_call.1} parent=1 // loop_pre_header
      _
    $region3: #{tpu_custom_call.1} parent=1 // loop_header
      %s13 = sphi 0, %s17
      %p14 = scmp.ge.s32.totalorder %s13, 4
      %s20 = sphi 0, %s32
      %s21 = sphi 0, %s28
      %s22 = sphi 0, %s20
      %s23 = sphi 0, %s21
      %s24 = sphi 0, %s22
      %s25 = sphi 0, %s23
      %s37 = sphi 0, %s39
      %s40 = sphi 0, %s37
      %s41 = sphi 0, %s40
      %s57 = sphi 0, %s41
      %s63 = sphi 0, %s65
      %s66 = sphi 0, %s63
      %s67 = sphi 0, %s66
      %s83 = sphi 0, %s67
    $region4: #{tpu_custom_call.1} parent=1 // loop_header_branch
      %16 = sbr.rel (%p14) target = $region8
    $region5: #{tpu_custom_call.1} parent=1 // loop_body
      %s18 = ssub.s32 %s13, 1
      %s19 = ssub.s32 %s13, 2
      %s26 = sadd.s32 1, %s21
      %p27 = scmp.ge.s32.totalorder %s26, 1
      %s28 = scalar_select %p27, 0, %s26
      %s29 = sadd.s32 1, %s20
      %s30 = scalar_select %p27, %s29, %s20
      %p31 = scmp.ge.s32.totalorder %s30, 2
      %s32 = scalar_select %p31, 0, %s30
      %s33 = ssub.s32 %s20, %s32
      %s34 = ssub.s32 %s21, %s28
      %s35 = sor.u32 %s33, %s34
      %p36 = scmp.eq.s32.totalorder %s35, 0
      %s38 = sadd.s32 %s37, 1
      %s39 = scalar_select %p36, %s37, %s38
      %p42 = pneg %p36
      %p43 = scmp.eq.s32.totalorder %s13, 1
      %p44 = por %p42, %p43
      %p45 = scmp.ne.s32.totalorder %s37, %s40
      %p46 = scmp.eq.s32.totalorder %s13, 0
      %p47 = por %p45, %p46
      %p48 = scmp.ne.s32.totalorder %s37, %s40
      %p49 = scmp.eq.s32.totalorder %s18, 1
      %p50 = por %p48, %p49
      %p51 = scmp.ne.s32.totalorder %s40, %s41
      %p52 = scmp.eq.s32.totalorder %s18, 0
      %p53 = por %p51, %p52
      %p54 = scmp.ne.s32.totalorder %s40, %s41
      %p55 = scmp.eq.s32.totalorder %s19, 1
      %p56 = por %p54, %p55
      %p58 = scmp.ne.s32.totalorder %s41, %s57
      %p59 = scmp.eq.s32.totalorder %s19, 0
      %p60 = por %p58, %p59
      %s61 = ssub.s32 %s20, %s32
      %p62 = scmp.eq.s32.totalorder %s61, 0
      %s64 = sadd.s32 %s63, 1
      %s65 = scalar_select %p62, %s63, %s64
      %p68 = pneg %p62
      %p69 = scmp.eq.s32.totalorder %s13, 1
      %p70 = por %p68, %p69
      %p71 = scmp.ne.s32.totalorder %s63, %s66
      %p72 = scmp.eq.s32.totalorder %s13, 0
      %p73 = por %p71, %p72
      %p74 = scmp.ne.s32.totalorder %s63, %s66
      %p75 = scmp.eq.s32.totalorder %s18, 1
      %p76 = por %p74, %p75
      %p77 = scmp.ne.s32.totalorder %s66, %s67
      %p78 = scmp.eq.s32.totalorder %s18, 0
      %p79 = por %p77, %p78
      %p80 = scmp.ne.s32.totalorder %s66, %s67
      %p81 = scmp.eq.s32.totalorder %s19, 1
      %p82 = por %p80, %p81
      %p84 = scmp.ne.s32.totalorder %s67, %s83
      %p85 = scmp.eq.s32.totalorder %s19, 0
      %p86 = por %p84, %p85
      %p87 = scmp.le.s32.totalorder 1, %s13
      %p88 = scmp.lt.s32.totalorder %s13, 3
      %p89 = pnand %p87, %p88
      %p90 = pneg %p89
      // Predicated region
      $region9: #{tpu_custom_call.1} parent=5 // pred_check
        _
      $region10: #{tpu_custom_call.1} parent=5 // pred_check_branch
        %92 = sbr.rel (%p89) target = $region12
      $region11: #{tpu_custom_call.1} parent=5 // pred_region
        %s93 = ssub.s32 %s13, 1
      $region12: #{tpu_custom_call.1} parent=5 // pred_fallthru
        _
      %p94 = scmp.lt.s32.totalorder %s13, 2
      // Predicated region
      $region13: #{tpu_custom_call.1} parent=5 // pred_check
        %p95 = pneg %p94
      $region14: #{tpu_custom_call.1} parent=5 // pred_check_branch
        %97 = sbr.rel (%p95) target = $region16
      $region15: #{tpu_custom_call.1} parent=5 // pred_region
        // Predicated region
        $region17: #{tpu_custom_call.1} parent=15 // pred_check
          %p98 = pneg %p47
        $region18: #{tpu_custom_call.1} parent=15 // pred_check_branch
          %100 = sbr.rel (%p98) target = $region20
        $region19: #{tpu_custom_call.1} parent=15 // pred_region
          %s101 = sand.u32 %s37, 1
          %s102 = scalar_lea.sflag [#allocation5], %s101
          %s103 = sand.u32 %s37, 1
          %s104 = smul.addr %s103, 4
          %s105 = scalar_lea.vmem [#allocation4], %s104
          %s107 = ssub.s32 64, 64
          %108 = vsyncadd %s102, %s107
          %s109 = smul.addr %s21, 4
          %s110 = smul.addr %s20, 4
          %s111 = sadd.s32 %s109, %s110
          %s112 = smul.addr %s111, 16
          %s113 = scalar_lea.hbm %s0, %s112
          %s115 = sshll.u32 %s105, 4
          %s116 = int_to_ptr.vmem [resolvable:$true] %s115
          %118 = dma.hbm_to_vmem [thread:$0]  %s113, 64, %s116, %s102
        $region20: #{tpu_custom_call.1} parent=15 // pred_fallthru
          _
      $region16: #{tpu_custom_call.1} parent=5 // pred_fallthru
        _
      %p119 = scmp.le.s32.totalorder 1, %s13
      %p120 = scmp.lt.s32.totalorder %s13, 3
      %p121 = pnand %p119, %p120
      %p122 = pneg %p121
      // Predicated region
      $region21: #{tpu_custom_call.1} parent=5 // pred_check
        _
      $region22: #{tpu_custom_call.1} parent=5 // pred_check_branch
        %124 = sbr.rel (%p121) target = $region24
      $region23: #{tpu_custom_call.1} parent=5 // pred_region
        %s125 = ssub.s32 %s13, 1
        %s126 = sand.u32 %s40, 1
        %s127 = scalar_lea.sflag [#allocation5], %s126
        %s128 = sand.u32 %s40, 1
        %s129 = smul.addr %s128, 4
        %s130 = scalar_lea.vmem [#allocation4], %s129
        // Predicated region
        $region25: #{tpu_custom_call.1} parent=23 // pred_check
          %p131 = pneg %p53
        $region26: #{tpu_custom_call.1} parent=23 // pred_check_branch
          %133 = sbr.rel (%p131) target = $region28
        $region27: #{tpu_custom_call.1} parent=23 // pred_region
          %134 = dma.done %s127, 64
        $region28: #{tpu_custom_call.1} parent=23 // pred_fallthru
          _
        %s135 = sand.u32 %s40, 1
        %s136 = scalar_lea.sflag [#allocation5], %s135
        %s137 = sand.u32 %s40, 1
        %s138 = smul.addr %s137, 4
        %s139 = scalar_lea.vmem [#allocation4], %s138
        %p140 = pneg %p53
        %p141 = pneg %p50
        %p142 = pneg %p79
        %p143 = pneg %p76
        %s144 = sand.u32 %s66, 1
        %s145 = scalar_lea.sflag [#allocation6], %s144
        %s146 = sand.u32 %s66, 1
        %s147 = smul.addr %s146, 8
        %s148 = scalar_lea.vmem [#allocation7], %s147
        %p149 = scmp.eq.s32.totalorder %s23, 0
        // Predicated region
        $region29: #{tpu_custom_call.1} parent=23 // pred_check
          %p150 = pneg %p149
        $region30: #{tpu_custom_call.1} parent=23 // pred_check_branch
          %152 = sbr.rel (%p150) target = $region32
        $region31: #{tpu_custom_call.1} parent=23 // pred_region
          %v153 = vlaneseq
          %vm154 = vcmp.ge.s32.totalorder %v153, 0
          %vm155 = vcmp.lt.s32.totalorder %v153, 512
          %vm156 = vmand %vm154, %vm155
          %157 = vst.msk [vmem:[#allocation2] sm:$0xf] %vm156, 0.0
          %158 = vst.msk [vmem:[#allocation3] sm:$0xf] %vm156, 0.0
        $region32: #{tpu_custom_call.1} parent=23 // pred_fallthru
          _
        %v159 = vld [vmem:[%s130] sm:$0xf]
        %v160 = vld [vmem:[#allocation2] sm:$0xf]
        %v161 = vadd.f32 %v159, 1e-20
        %v162 = vand.u32 2147483647, %v161
        %v163 = vadd.f32 %v160, %v162
        %v164 = vlaneseq
        %vm165 = vcmp.ge.s32.totalorder %v164, 0
        %vm166 = vcmp.lt.s32.totalorder %v164, 512
        %vm167 = vmand %vm165, %vm166
        %168 = vst.msk [vmem:[#allocation2] sm:$0xf] %vm167, %v163
        %v169 = vld [vmem:[#allocation3] sm:$0xf]
        %v170 = vadd.f32 %v169, %v159
        %171 = vst.msk [vmem:[#allocation3] sm:$0xf] %vm167, %v170
        // Predicated region
        $region33: #{tpu_custom_call.1} parent=23 // pred_check
          %p172 = pneg %p149
        $region34: #{tpu_custom_call.1} parent=23 // pred_check_branch
          %174 = sbr.rel (%p172) target = $region36
        $region35: #{tpu_custom_call.1} parent=23 // pred_region
          %v175 = vld [vmem:[#allocation2] sm:$0xf]
          %v177 = vlaneseq
          %v178 = vshrl.u32 %v177, 7
          %v179 = vsub.s32 0, %v178
          %v180 = vrot.slane %v175, %v179
          %v181 = vlaneseq
          %v182 = vshrl.u32 %v181, 7
          %v183 = vsub.s32 1, %v182
          %v184 = vrot.slane %v175, %v183
          %v185 = vlaneseq
          %v186 = vshrl.u32 %v185, 7
          %v187 = vsub.s32 2, %v186
          %v188 = vrot.slane %v175, %v187
          %v189 = vlaneseq
          %v190 = vshrl.u32 %v189, 7
          %v191 = vsub.s32 3, %v190
          %v192 = vrot.slane %v175, %v191
          %vm197 = vcmask 1040384
          %v198 = vsel %vm197, %v180, 0.0
          %v199 = vsel %vm197, %v184, 0.0
          %v200 = vadd.f32 %v198, %v199
          %v201 = vsel %vm197, %v188, 0.0
          %v202 = vadd.f32 %v200, %v201
          %v203 = vsel %vm197, %v192, 0.0
          %v204 = vadd.f32 %v202, %v203
          %205 = vadd.xlane.f32.xlu0 %v204
          %v206 = vpop.xlane.xlu0 %205
          %v207 = vrot.slane %v206, 4
          %v208 = vadd.f32 %v206, %v207
          %v209 = vrot.slane %v208, 2
          %v210 = vadd.f32 %v208, %v209
          %v211 = vrot.slane %v210, 1
          %v212 = vadd.f32 %v210, %v211
          %s213 = vtos %v212
          %v214 = vld [vmem:[#allocation3] sm:$0xf]
          %v216 = vlaneseq
          %v217 = vshrl.u32 %v216, 7
          %v218 = vsub.s32 0, %v217
          %v219 = vrot.slane %v214, %v218
          %v220 = vlaneseq
          %v221 = vshrl.u32 %v220, 7
          %v222 = vsub.s32 1, %v221
          %v223 = vrot.slane %v214, %v222
          %v224 = vlaneseq
          %v225 = vshrl.u32 %v224, 7
          %v226 = vsub.s32 2, %v225
          %v227 = vrot.slane %v214, %v226
          %v228 = vlaneseq
          %v229 = vshrl.u32 %v228, 7
          %v230 = vsub.s32 3, %v229
          %v231 = vrot.slane %v214, %v230
          %v236 = vsel %vm197, %v219, 0.0
          %v237 = vsel %vm197, %v223, 0.0
          %v238 = vadd.f32 %v236, %v237
          %v239 = vsel %vm197, %v227, 0.0
          %v240 = vadd.f32 %v238, %v239
          %v241 = vsel %vm197, %v231, 0.0
          %v242 = vadd.f32 %v240, %v241
          %243 = vadd.xlane.f32.xlu0 %v242
          %v244 = vpop.xlane.xlu0 %243
          %v245 = vrot.slane %v244, 4
          %v246 = vadd.f32 %v244, %v245
          %v247 = vrot.slane %v246, 2
          %v248 = vadd.f32 %v246, %v247
          %v249 = vrot.slane %v248, 1
          %v250 = vadd.f32 %v248, %v249
          %s251 = vtos %v250
          %s252 = sadd.f32 %s251, 5.12e-38
          %s253 = smul.f32 %s213, %s213
          %s254 = smul.f32 %s253, 0.022097087
          %v255 = vstv %s252
          %v256 = vrcp.pop %v255
          %s257 = vtos %v256
          %s258 = smul.f32 %s254, %s257
          %v259 = vstv %s258
          %260 = vst [vmem:[%s148] sm:$0xff] %v259
        $region36: #{tpu_custom_call.1} parent=23 // pred_fallthru
          _
        %s261 = sand.u32 %s66, 1
        %s262 = scalar_lea.sflag [#allocation6], %s261
        %s263 = sand.u32 %s66, 1
        %s264 = smul.addr %s263, 8
        %s265 = scalar_lea.vmem [#allocation7], %s264
        // Predicated region
        $region37: #{tpu_custom_call.1} parent=23 // pred_check
          %p266 = pneg %p76
        $region38: #{tpu_custom_call.1} parent=23 // pred_check_branch
          %268 = sbr.rel (%p266) target = $region40
        $region39: #{tpu_custom_call.1} parent=23 // pred_region
          %s270 = ssub.s32 128, 128
          %271 = vsyncadd %s262, %s270
          %s272 = smul.addr %s22, 128
          %s273 = scalar_lea.hbm %s1, %s272
          %s275 = sshll.u32 %s265, 4
          %s276 = int_to_ptr.vmem [resolvable:$true] %s275
          %278 = dma.vmem_to_hbm [thread:$0]  %s276, 128, %s273, %s262
        $region40: #{tpu_custom_call.1} parent=23 // pred_fallthru
          _
      $region24: #{tpu_custom_call.1} parent=5 // pred_fallthru
        _
      %p279 = scmp.le.s32.totalorder 2, %s13
      // Predicated region
      $region41: #{tpu_custom_call.1} parent=5 // pred_check
        %p280 = pneg %p279
      $region42: #{tpu_custom_call.1} parent=5 // pred_check_branch
        %282 = sbr.rel (%p280) target = $region44
      $region43: #{tpu_custom_call.1} parent=5 // pred_region
        %s283 = ssub.s32 %s13, 2
        // Predicated region
        $region45: #{tpu_custom_call.1} parent=43 // pred_check
          %p284 = pneg %p82
        $region46: #{tpu_custom_call.1} parent=43 // pred_check_branch
          %286 = sbr.rel (%p284) target = $region48
        $region47: #{tpu_custom_call.1} parent=43 // pred_region
          %s287 = sand.u32 %s67, 1
          %s288 = scalar_lea.sflag [#allocation6], %s287
          %s289 = sand.u32 %s67, 1
          %s290 = smul.addr %s289, 8
          %s291 = scalar_lea.vmem [#allocation7], %s290
          %292 = dma.done %s288, 128
        $region48: #{tpu_custom_call.1} parent=43 // pred_fallthru
          _
      $region44: #{tpu_custom_call.1} parent=5 // pred_fallthru
        _
    $region6: #{tpu_custom_call.1} parent=1 // loop_footer
      %s17 = sadd.s32 1, %s13
    $region7: #{tpu_custom_call.1} parent=1 // loop_footer_branch
      %12 = sbr.rel target = $region3
    $region8: #{tpu_custom_call.1} parent=1 // loop_exit
      _
    %293 = vsyncpa [#allocation5], 1
    %s294 = scalar_lea.sflag [#allocation5], 1
    %295 = vsyncpa %s294, 1
    %296 = vsyncpa [#allocation6], 1
    %s297 = scalar_lea.sflag [#allocation6], 1
    %298 = vsyncpa %s297, 1

</llo_original>
